<compile_context>
chip_gen: v6e
topology: v6e:2x2x1
jax: 0.10.0
libtpu: 0.0.40
codegen_flags: <defaults>
</compile_context>

<pallas_src>
import jax
import jax.numpy as jnp
from jax.experimental import pallas as pl
from jax.experimental.pallas import tpu as pltpu

BN_EPS = 1e-5


def _hand_fuzing_kernel(x_ref, wbd_ref, b12_ref, wf_ref, gb_ref, out_ref):
    # Fused first layer: X = [x_hand | x_dots], Wbd = blockdiag(W1, W2), b = [b1|b2]
    h = jnp.dot(x_ref[...], wbd_ref[...], preferred_element_type=jnp.float32)
    h = jnp.maximum(h + b12_ref[...], 0.0)      # == concat(h1, h2)

    # Final Linear; `bf` omitted (cancelled by BatchNorm mean subtraction below).
    z = jnp.dot(h, wf_ref[...], preferred_element_type=jnp.float32)

    # BatchNorm1d(5), training-mode batch statistics (biased variance), one-pass var.
    mean = jnp.mean(z, axis=0, keepdims=True)
    mean_sq = jnp.mean(z * z, axis=0, keepdims=True)
    var = jnp.maximum(mean_sq - mean * mean, 0.0)
    zn = (z - mean) * jax.lax.rsqrt(var + BN_EPS)

    gb = gb_ref[...]                            # (2, 5): row 0 = gamma, row 1 = beta
    y = zn * gb[0:1, :] + gb[1:2, :]

    out_ref[...] = jnp.maximum(y, 0.0)          # final ReLU


def pack_params(params):
    """One-time host-side packing of the module parameters for the fused kernel.

    Builds the block-diagonal first-layer weight, the concatenated first-layer
    bias, and the stacked gamma/beta. `bf` is dropped (mathematically dead after
    the BatchNorm mean subtraction).
    """
    w1, w2 = params["w1"], params["w2"]
    f1, h = w1.shape
    f2, _ = w2.shape
    wbd = jnp.zeros((f1 + f2, 2 * h), jnp.float32)
    wbd = wbd.at[:f1, :h].set(w1)
    wbd = wbd.at[f1:, h:].set(w2)
    b12 = jnp.concatenate([params["b1"], params["b2"]], axis=1)       # (1, 2H)
    gb = jnp.concatenate([params["gamma"], params["beta"]], axis=0)   # (2, 5)
    return dict(wbd=wbd, b12=b12, wf=params["wf"], gb=gb)


def hand_fuzing_forward(x_hand, x_dots_hand, packed):
    """Run the fused forward pass in one Pallas kernel (whole problem fits VMEM)."""
    B = x_hand.shape[0]
    x = jnp.concatenate([x_hand, x_dots_hand], axis=1)                # (B, F1+F2)

    vmem = pl.BlockSpec(memory_space=pltpu.MemorySpace.VMEM)
    # TODO(synk): for large B (>~4K rows) add a batch grid with a two-pass
    # BatchNorm (sum / sum-of-squares accumulator on an "arbitrary" reduction
    # axis, then a "parallel" normalize pass) and size the row tile per chip
    # generation (v7x has 64 MiB VMEM vs 128 MiB on v5e/v6e); optionally cast
    # the MXU operands to bf16 on v6e/v7x.
    return pl.pallas_call(
        _hand_fuzing_kernel,
        out_shape=jax.ShapeDtypeStruct((B, 5), jnp.float32),
        in_specs=[vmem] * 5,
        out_specs=vmem,
    )(x, packed["wbd"], packed["b12"], packed["wf"], packed["gb"])


def init_params(key, n_hidden_neurons, num_hand_features, num_hand_dots_features):
    """Deterministic PyTorch-Linear-style init: U(-1/sqrt(fan_in), 1/sqrt(fan_in))."""
    ks = jax.random.split(key, 6)

    def lin(kw, kb, fan_in, fan_out):
        bound = 1.0 / jnp.sqrt(jnp.float32(fan_in))
        w = jax.random.uniform(kw, (fan_in, fan_out), jnp.float32, -bound, bound)
        b = jax.random.uniform(kb, (1, fan_out), jnp.float32, -bound, bound)
        return w, b

    w1, b1 = lin(ks[0], ks[1], num_hand_features, n_hidden_neurons)
    w2, b2 = lin(ks[2], ks[3], num_hand_dots_features, n_hidden_neurons)
    wf, bf = lin(ks[4], ks[5], 2 * n_hidden_neurons, 5)
    gamma = jnp.ones((1, 5), jnp.float32)   # BatchNorm1d weight init
    beta = jnp.zeros((1, 5), jnp.float32)   # BatchNorm1d bias init
    return dict(w1=w1, b1=b1, w2=w2, b2=b2, wf=wf, bf=bf, gamma=gamma, beta=beta)


def _reference_forward(x_hand, x_dots_hand, p):
    """Pure-JAX reference mirroring the PyTorch module (keeps bf to prove it is dead)."""
    h1 = jnp.maximum(x_hand @ p["w1"] + p["b1"], 0.0)
    h2 = jnp.maximum(x_dots_hand @ p["w2"] + p["b2"], 0.0)
    fuze = jnp.concatenate([h1, h2], axis=1)
    z = fuze @ p["wf"] + p["bf"]
    mean = jnp.mean(z, axis=0, keepdims=True)
    var = jnp.mean((z - mean) ** 2, axis=0, keepdims=True)
    y = (z - mean) / jnp.sqrt(var + BN_EPS) * p["gamma"] + p["beta"]
    return jnp.maximum(y, 0.0)


if __name__ == "__main__":
    # Small deterministic example shapes
    batch = 8
    n_hidden_neurons = 32
    num_hand_features = 32
    num_hand_dots_features = 16

    key = jax.random.PRNGKey(0)
    k_x1, k_x2, k_p = jax.random.split(key, 3)

    x_hand = jax.random.normal(k_x1, (batch, num_hand_features), jnp.float32)
    x_dots_hand = jax.random.normal(k_x2, (batch, num_hand_dots_features), jnp.float32)

    params = init_params(k_p, n_hidden_neurons, num_hand_features, num_hand_dots_features)
    packed = pack_params(params)

    out = hand_fuzing_forward(x_hand, x_dots_hand, packed)
    out = jax.block_until_ready(out)

    ref = jax.block_until_ready(_reference_forward(x_hand, x_dots_hand, params))
    assert out.shape == (batch, 5)
    assert jnp.allclose(out, ref, atol=1e-4, rtol=1e-4)

    print("KERNEL_OK")
</pallas_src>

<mosaic_0001>
module attributes {stable_mosaic.version = 11 : i64} {
  func.func @_hand_fuzing_kernel(%arg0: memref<8x48xf32, #tpu.memory_space<vmem>>, %arg1: memref<48x64xf32, #tpu.memory_space<vmem>>, %arg2: memref<1x64xf32, #tpu.memory_space<vmem>>, %arg3: memref<64x5xf32, #tpu.memory_space<vmem>>, %arg4: memref<2x5xf32, #tpu.memory_space<vmem>>, %arg5: memref<8x5xf32, #tpu.memory_space<vmem>>) attributes {dimension_semantics = [], scalar_prefetch = 0 : i64, scratch_operands = 0 : i64, tpu.core_type = #tpu.core_type<tc>} {
    %c0 = arith.constant 0 : index
    %c0_0 = arith.constant 0 : index
    %0 = vector.load %arg0[%c0, %c0_0] : memref<8x48xf32, #tpu.memory_space<vmem>>, vector<8x48xf32>
    %c0_1 = arith.constant 0 : index
    %c0_2 = arith.constant 0 : index
    %1 = vector.load %arg1[%c0_1, %c0_2] : memref<48x64xf32, #tpu.memory_space<vmem>>, vector<48x64xf32>
    %cst = arith.constant dense<0.000000e+00> : vector<8x64xf32>
    %2 = tpu.matmul %0, %1, %cst {dimension_numbers = #tpu.dot_dimension_numbers<[1], [0], [0], [1], [0, 0, 1, 1], [], []>} : vector<8x48xf32>, vector<48x64xf32>, vector<8x64xf32> -> vector<8x64xf32>
    %c0_3 = arith.constant 0 : index
    %c0_4 = arith.constant 0 : index
    %3 = vector.load %arg2[%c0_3, %c0_4] : memref<1x64xf32, #tpu.memory_space<vmem>>, vector<1x64xf32>
    %4 = vector.broadcast %3 : vector<1x64xf32> to vector<8x64xf32>
    %5 = arith.addf %2, %4 : vector<8x64xf32>
    %cst_5 = arith.constant 0.000000e+00 : f32
    %6 = vector.broadcast %cst_5 : f32 to vector<8x64xf32>
    %7 = arith.maximumf %5, %6 : vector<8x64xf32>
    %c0_6 = arith.constant 0 : index
    %c0_7 = arith.constant 0 : index
    %8 = vector.load %arg3[%c0_6, %c0_7] : memref<64x5xf32, #tpu.memory_space<vmem>>, vector<64x5xf32>
    %cst_8 = arith.constant dense<0.000000e+00> : vector<8x5xf32>
    %9 = tpu.matmul %7, %8, %cst_8 {dimension_numbers = #tpu.dot_dimension_numbers<[1], [0], [0], [1], [0, 0, 1, 1], [], []>} : vector<8x64xf32>, vector<64x5xf32>, vector<8x5xf32> -> vector<8x5xf32>
    %cst_9 = arith.constant dense<0.000000e+00> : vector<5xf32>
    %10 = vector.multi_reduction <add>, %9, %cst_9 [0] : vector<8x5xf32> to vector<5xf32>
    %11 = vector.shape_cast %10 : vector<5xf32> to vector<1x5xf32>
    %cst_10 = arith.constant 8.000000e+00 : f32
    %12 = vector.broadcast %cst_10 : f32 to vector<1x5xf32>
    %13 = arith.divf %11, %12 : vector<1x5xf32>
    %14 = arith.mulf %9, %9 : vector<8x5xf32>
    %cst_11 = arith.constant dense<0.000000e+00> : vector<5xf32>
    %15 = vector.multi_reduction <add>, %14, %cst_11 [0] : vector<8x5xf32> to vector<5xf32>
    %16 = vector.shape_cast %15 : vector<5xf32> to vector<1x5xf32>
    %cst_12 = arith.constant 8.000000e+00 : f32
    %17 = vector.broadcast %cst_12 : f32 to vector<1x5xf32>
    %18 = arith.divf %16, %17 : vector<1x5xf32>
    %19 = arith.mulf %13, %13 : vector<1x5xf32>
    %20 = arith.subf %18, %19 : vector<1x5xf32>
    %cst_13 = arith.constant 0.000000e+00 : f32
    %21 = vector.broadcast %cst_13 : f32 to vector<1x5xf32>
    %22 = arith.maximumf %20, %21 : vector<1x5xf32>
    %23 = vector.broadcast %13 : vector<1x5xf32> to vector<8x5xf32>
    %24 = arith.subf %9, %23 : vector<8x5xf32>
    %cst_14 = arith.constant 9.99999974E-6 : f32
    %25 = vector.broadcast %cst_14 : f32 to vector<1x5xf32>
    %26 = arith.addf %22, %25 : vector<1x5xf32>
    %27 = math.rsqrt %26 : vector<1x5xf32>
    %28 = vector.broadcast %27 : vector<1x5xf32> to vector<8x5xf32>
    %29 = arith.mulf %24, %28 : vector<8x5xf32>
    %c0_15 = arith.constant 0 : index
    %c0_16 = arith.constant 0 : index
    %30 = vector.load %arg4[%c0_15, %c0_16] : memref<2x5xf32, #tpu.memory_space<vmem>>, vector<2x5xf32>
    %31 = vector.extract_strided_slice %30 {offsets = [0, 0], sizes = [1, 5], strides = [1, 1]} : vector<2x5xf32> to vector<1x5xf32>
    %32 = vector.broadcast %31 : vector<1x5xf32> to vector<8x5xf32>
    %33 = arith.mulf %29, %32 : vector<8x5xf32>
    %34 = vector.extract_strided_slice %30 {offsets = [1, 0], sizes = [1, 5], strides = [1, 1]} : vector<2x5xf32> to vector<1x5xf32>
    %35 = vector.broadcast %34 : vector<1x5xf32> to vector<8x5xf32>
    %36 = arith.addf %33, %35 : vector<8x5xf32>
    %cst_17 = arith.constant 0.000000e+00 : f32
    %37 = vector.broadcast %cst_17 : f32 to vector<8x5xf32>
    %38 = arith.maximumf %36, %37 : vector<8x5xf32>
    %c0_18 = arith.constant 0 : index
    %c0_19 = arith.constant 0 : index
    %39 = vector.load %arg5[%c0_18, %c0_19] : memref<8x5xf32, #tpu.memory_space<vmem>>, vector<8x5xf32>
    tpu.vector_store %arg5[%c0_18, %c0_19], %38 {strides = array<i32>} : memref<8x5xf32, #tpu.memory_space<vmem>>, vector<8x5xf32>,
    return
  }
}

</mosaic_0001>

<llo_original>
// kernel: tpu_custom_call.1
$region0: #{tpu_custom_call.1}
  #allocation0 [shape = 'u32[]', space=smem, size = 0x4, offset = 0x4, fixed_abs, tag = 'smem constant byte address 0x4 - core index']
  #allocation1 [shape = 'u32[144,128]{1,0:T(1,128)}', space=vmem, size = 0x12000, scoped, tag = 'internal scratch']
  %s0 = inlined_call_operand.vmem [shape: f32[8,48], index: 0, kind: input, shape index: {}]
  %s1 = inlined_call_operand.vmem [shape: f32[48,64], index: 1, kind: input, shape index: {}]
  %s2 = inlined_call_operand.vmem [shape: f32[1,64], index: 2, kind: input, shape index: {}]
  %s3 = inlined_call_operand.vmem [shape: f32[64,5], index: 3, kind: input, shape index: {}]
  %s4 = inlined_call_operand.vmem [shape: f32[2,5], index: 4, kind: input, shape index: {}]
  %s5 = inlined_call_operand.hbm [shape: f32[8,5], index: 5, kind: output, shape index: {}]
  %s6 = sld [smem:[#allocation0]]
  $region30: #{tpu_custom_call.1} parent=0
    _
  %s8 = ssub.s32 1, %s6
  %s9 = scalar_select 0, %s8, %s6
  $region1: #{tpu_custom_call.1} parent=0
    #allocation2 [shape = 'u8[4096]{0}', space=vmem, size = 0x1000, scoped, tag = 'output window, operand 0, single buffered']
    #allocation3 [shape = 's32[1]{0}', space=sflag, size = 0x4, scoped, tag = 'scoped memory for tpu_custom_call.1']
    %10 = vsyncpa [#allocation3], 0
    // Predicated region
    $region2: #{tpu_custom_call.1} parent=1 // pred_check
      _
    $region3: #{tpu_custom_call.1} parent=1 // pred_check_branch
      %12 = sbr.rel (0) target = $region5
    $region4: #{tpu_custom_call.1} parent=1 // pred_region
      _
    $region5: #{tpu_custom_call.1} parent=1 // pred_fallthru
      _
    // Predicated region
    $region6: #{tpu_custom_call.1} parent=1 // pred_check
      _
    $region7: #{tpu_custom_call.1} parent=1 // pred_check_branch
      %14 = sbr.rel (0) target = $region9
    $region8: #{tpu_custom_call.1} parent=1 // pred_region
      _
    $region9: #{tpu_custom_call.1} parent=1 // pred_fallthru
      _
    // Predicated region
    $region10: #{tpu_custom_call.1} parent=1 // pred_check
      _
    $region11: #{tpu_custom_call.1} parent=1 // pred_check_branch
      %16 = sbr.rel (0) target = $region13
    $region12: #{tpu_custom_call.1} parent=1 // pred_region
      _
    $region13: #{tpu_custom_call.1} parent=1 // pred_fallthru
      _
    // Predicated region
    $region14: #{tpu_custom_call.1} parent=1 // pred_check
      _
    $region15: #{tpu_custom_call.1} parent=1 // pred_check_branch
      %18 = sbr.rel (0) target = $region17
    $region16: #{tpu_custom_call.1} parent=1 // pred_region
      _
    $region17: #{tpu_custom_call.1} parent=1 // pred_fallthru
      _
    // Predicated region
    $region18: #{tpu_custom_call.1} parent=1 // pred_check
      _
    $region19: #{tpu_custom_call.1} parent=1 // pred_check_branch
      %20 = sbr.rel (0) target = $region21
    $region20: #{tpu_custom_call.1} parent=1 // pred_region
      _
    $region21: #{tpu_custom_call.1} parent=1 // pred_fallthru
      _
    %v21 = vld [vmem:[%s0] sm:$0xff]
    %v22 = vld [vmem:[%s1] sm:$0xff]
    %v23 = vld [vmem:[%s1 + $0x8] sm:$0xff]
    %v24 = vld [vmem:[%s1 + $0x10] sm:$0xff]
    %v25 = vld [vmem:[%s1 + $0x18] sm:$0xff]
    %v26 = vld [vmem:[%s1 + $0x20] sm:$0xff]
    %v27 = vld [vmem:[%s1 + $0x28] sm:$0xff]
    %v28 = vld [vmem:[%s2] sm:$0x1]
    %v30 = vlaneseq
    %v31 = vshrl.u32 %v30, 7
    %v32 = vsub.s32 0, %v31
    %v33 = vrot.slane %v28, %v32
    %vm35 = vcmask 392192
    %v37 = vsel %vm35, %v21, 0
    %39 = vmatprep.subr.mxu0 0.0
    %40 = vmatpush1.msra.mxu0 0.0
    %41 = vmatprep.subr.mxu0 0.0
    %42 = vmatpush1.msra.mxu0 0.0
    %43 = vmatprep.subr.mxu0 0.0
    %44 = vmatpush1.msra.mxu0 0.0
    %45 = vmatprep.subr.mxu0 0.0
    %46 = vmatpush1.msra.mxu0 0.0
    %47 = vmatprep.subr.mxu0 0.0
    %48 = vmatpush1.msra.mxu0 0.0
    %49 = vmatprep.subr.mxu0 0.0
    %50 = vmatpush1.msra.mxu0 0.0
    %51 = vmatprep.subr.mxu0 0.0
    %52 = vmatpush1.msra.mxu0 0.0
    %53 = vmatprep.subr.mxu0 0.0
    %54 = vmatpush1.msra.mxu0 0.0
    %55 = vmatprep.subr.mxu0 0.0
    %56 = vmatpush1.msra.mxu0 0.0
    %57 = vmatprep.subr.mxu0 0.0
    %58 = vmatpush1.msra.mxu0 0.0
    %59 = vmatprep.subr.mxu0 0.0
    %60 = vmatpush1.msra.mxu0 %v27
    %61 = vmatprep.subr.mxu0 0.0
    %62 = vmatpush1.msra.mxu0 %v26
    %63 = vmatprep.subr.mxu0 0.0
    %64 = vmatpush1.msra.mxu0 %v25
    %65 = vmatprep.subr.mxu0 0.0
    %66 = vmatpush1.msra.mxu0 %v24
    %67 = vmatprep.subr.mxu0 0.0
    %68 = vmatpush1.msra.mxu0 %v23
    %69 = vmatprep.subr.mxu0 0.0
    %70 = vmatpush1.msra.mxu0 %v22
    %71 = vmatprep.subr.mxu0 0.0
    %72 = vmatpush2.msra.mxu0 0.0
    %73 = vmatprep.subr.mxu0 0.0
    %74 = vmatpush2.msra.mxu0 0.0
    %75 = vmatprep.subr.mxu0 0.0
    %76 = vmatpush2.msra.mxu0 0.0
    %77 = vmatprep.subr.mxu0 0.0
    %78 = vmatpush2.msra.mxu0 0.0
    %79 = vmatprep.subr.mxu0 0.0
    %80 = vmatpush2.msra.mxu0 0.0
    %81 = vmatprep.subr.mxu0 0.0
    %82 = vmatpush2.msra.mxu0 0.0
    %83 = vmatprep.subr.mxu0 0.0
    %84 = vmatpush2.msra.mxu0 0.0
    %85 = vmatprep.subr.mxu0 0.0
    %86 = vmatpush2.msra.mxu0 0.0
    %87 = vmatprep.subr.mxu0 0.0
    %88 = vmatpush2.msra.mxu0 0.0
    %89 = vmatprep.subr.mxu0 0.0
    %90 = vmatpush2.msra.mxu0 0.0
    %91 = vmatprep.subr.mxu0 0.0
    %92 = vmatpush2.msra.mxu0 0.0
    %93 = vmatprep.subr.mxu0 0.0
    %94 = vmatpush2.msra.mxu0 0.0
    %95 = vmatprep.subr.mxu0 0.0
    %96 = vmatpush2.msra.mxu0 0.0
    %97 = vmatprep.subr.mxu0 0.0
    %98 = vmatpush2.msra.mxu0 0.0
    %99 = vmatprep.subr.mxu0 0.0
    %100 = vmatpush2.msra.mxu0 0.0
    %101 = vmatprep.subr.mxu0 0.0
    %102 = vmatpush2.msra.mxu0 0.0
    %103 = vmatprep.mubr.f32.mxu0 0.0
    %104 = vmatmul.mubr.f32.gmra.mxu0 %v37
    %v105 = vpop.f32.mrf.mxu0
    %v106 = vadd.f32 %v33, %v105
    %v107 = vpop.f32.mrf.mxu0
    %108 = vdwg.mxu0
    %v109 = vmax.f32 %v106, 0.0
    %v110 = vld [vmem:[%s3] sm:$0xff]
    %v111 = vld [vmem:[%s3 + $0x8] sm:$0xff]
    %v112 = vld [vmem:[%s3 + $0x10] sm:$0xff]
    %v113 = vld [vmem:[%s3 + $0x18] sm:$0xff]
    %v114 = vld [vmem:[%s3 + $0x20] sm:$0xff]
    %v115 = vld [vmem:[%s3 + $0x28] sm:$0xff]
    %v116 = vld [vmem:[%s3 + $0x30] sm:$0xff]
    %v117 = vld [vmem:[%s3 + $0x38] sm:$0xff]
    %vm118 = vcmask 523264
    %v120 = vsel %vm118, %v109, 0
    %122 = vmatprep.subr.mxu0 0.0
    %123 = vmatpush1.msra.mxu0 0.0
    %124 = vmatprep.subr.mxu0 0.0
    %125 = vmatpush1.msra.mxu0 0.0
    %126 = vmatprep.subr.mxu0 0.0
    %127 = vmatpush1.msra.mxu0 0.0
    %128 = vmatprep.subr.mxu0 0.0
    %129 = vmatpush1.msra.mxu0 0.0
    %130 = vmatprep.subr.mxu0 0.0
    %131 = vmatpush1.msra.mxu0 0.0
    %132 = vmatprep.subr.mxu0 0.0
    %133 = vmatpush1.msra.mxu0 0.0
    %134 = vmatprep.subr.mxu0 0.0
    %135 = vmatpush1.msra.mxu0 0.0
    %136 = vmatprep.subr.mxu0 0.0
    %137 = vmatpush1.msra.mxu0 0.0
    %138 = vmatprep.subr.mxu0 0.0
    %139 = vmatpush1.msra.mxu0 %v117
    %140 = vmatprep.subr.mxu0 0.0
    %141 = vmatpush1.msra.mxu0 %v116
    %142 = vmatprep.subr.mxu0 0.0
    %143 = vmatpush1.msra.mxu0 %v115
    %144 = vmatprep.subr.mxu0 0.0
    %145 = vmatpush1.msra.mxu0 %v114
    %146 = vmatprep.subr.mxu0 0.0
    %147 = vmatpush1.msra.mxu0 %v113
    %148 = vmatprep.subr.mxu0 0.0
    %149 = vmatpush1.msra.mxu0 %v112
    %150 = vmatprep.subr.mxu0 0.0
    %151 = vmatpush1.msra.mxu0 %v111
    %152 = vmatprep.subr.mxu0 0.0
    %153 = vmatpush1.msra.mxu0 %v110
    %154 = vmatprep.subr.mxu0 0.0
    %155 = vmatpush2.msra.mxu0 0.0
    %156 = vmatprep.subr.mxu0 0.0
    %157 = vmatpush2.msra.mxu0 0.0
    %158 = vmatprep.subr.mxu0 0.0
    %159 = vmatpush2.msra.mxu0 0.0
    %160 = vmatprep.subr.mxu0 0.0
    %161 = vmatpush2.msra.mxu0 0.0
    %162 = vmatprep.subr.mxu0 0.0
    %163 = vmatpush2.msra.mxu0 0.0
    %164 = vmatprep.subr.mxu0 0.0
    %165 = vmatpush2.msra.mxu0 0.0
    %166 = vmatprep.subr.mxu0 0.0
    %167 = vmatpush2.msra.mxu0 0.0
    %168 = vmatprep.subr.mxu0 0.0
    %169 = vmatpush2.msra.mxu0 0.0
    %170 = vmatprep.subr.mxu0 0.0
    %171 = vmatpush2.msra.mxu0 0.0
    %172 = vmatprep.subr.mxu0 0.0
    %173 = vmatpush2.msra.mxu0 0.0
    %174 = vmatprep.subr.mxu0 0.0
    %175 = vmatpush2.msra.mxu0 0.0
    %176 = vmatprep.subr.mxu0 0.0
    %177 = vmatpush2.msra.mxu0 0.0
    %178 = vmatprep.subr.mxu0 0.0
    %179 = vmatpush2.msra.mxu0 0.0
    %180 = vmatprep.subr.mxu0 0.0
    %181 = vmatpush2.msra.mxu0 0.0
    %182 = vmatprep.subr.mxu0 0.0
    %183 = vmatpush2.msra.mxu0 0.0
    %184 = vmatprep.subr.mxu0 0.0
    %185 = vmatpush2.msra.mxu0 0.0
    %186 = vmatprep.mubr.f32.mxu0 0.0
    %187 = vmatmul.mubr.f32.gmra.mxu0 %v120
    %v188 = vpop.f32.mrf.mxu0
    %v189 = vadd.f32 0.0, %v188
    %v190 = vpop.f32.mrf.mxu0
    %191 = vdwg.mxu0
    %vm192 = vcmask 39936
    %v193 = vsel %vm192, %v189, 0.0
    %v194 = vrot.slane %v193, 4
    %v195 = vadd.f32 %v193, %v194
    %v196 = vrot.slane %v195, 2
    %v197 = vadd.f32 %v195, %v196
    %v198 = vrot.slane %v197, 1
    %v199 = vadd.f32 %v197, %v198
    %v200 = vrcp.pop 8.0
    %v201 = vmul.f32 %v199, %v200
    %v202 = vmul.f32 %v189, %v189
    %v203 = vsel %vm192, %v202, 0.0
    %v204 = vrot.slane %v203, 4
    %v205 = vadd.f32 %v203, %v204
    %v206 = vrot.slane %v205, 2
    %v207 = vadd.f32 %v205, %v206
    %v208 = vrot.slane %v207, 1
    %v209 = vadd.f32 %v207, %v208
    %v210 = vmul.f32 %v209, %v200
    %v211 = vmul.f32 %v201, %v201
    %v212 = vsub.f32 %v210, %v211
    %v213 = vmax.f32 %v212, 0.0
    %v214 = vsub.f32 %v189, %v201
    %v215 = vadd.f32 %v213, 1e-05
    %v216 = vrsqrt.pop %v215
    %v217 = vmul.f32 %v214, %v216
    %v218 = vld [vmem:[%s4] sm:$0x3]
    %v219 = vlaneseq
    %v220 = vshrl.u32 %v219, 7
    %v221 = vsub.s32 0, %v220
    %v222 = vrot.slane %v218, %v221
    %v223 = vmul.f32 %v217, %v222
    %v224 = vlaneseq
    %v225 = vshrl.u32 %v224, 7
    %v226 = vsub.s32 1, %v225
    %v227 = vrot.slane %v218, %v226
    %v228 = vadd.f32 %v223, %v227
    %v229 = vmax.f32 %v228, 0.0
    %230 = vst.msk [vmem:[#allocation2] sm:$0xff] %vm192, %v229
    // Predicated region
    $region22: #{tpu_custom_call.1} parent=1 // pred_check
      _
    $region23: #{tpu_custom_call.1} parent=1 // pred_check_branch
      %232 = sbr.rel (0) target = $region25
    $region24: #{tpu_custom_call.1} parent=1 // pred_region
      %s234 = ssub.s32 128, 128
      %235 = vsyncadd [#allocation3], %s234
      %s237 = sshll.u32 [#allocation2], 4
      %s238 = int_to_ptr.vmem [resolvable:$true] %s237
      %240 = dma.vmem_to_hbm [thread:$0]  %s238, 128, %s5, [#allocation3]
    $region25: #{tpu_custom_call.1} parent=1 // pred_fallthru
      _
    // Predicated region
    $region26: #{tpu_custom_call.1} parent=1 // pred_check
      _
    $region27: #{tpu_custom_call.1} parent=1 // pred_check_branch
      %242 = sbr.rel (0) target = $region29
    $region28: #{tpu_custom_call.1} parent=1 // pred_region
      %243 = dma.done [#allocation3], 128
    $region29: #{tpu_custom_call.1} parent=1 // pred_fallthru
      _
    %244 = vsyncpa [#allocation3], 1

</llo_original>
